<compile_context>
chip_gen: v5e
topology: v5e:2x2
jax: 0.10.0
libtpu: 0.0.40
codegen_flags: <defaults>
</compile_context>

<pallas_src>
import jax
import jax.numpy as jnp
from jax.experimental import pallas as pl
from jax.experimental.pallas import tpu as pltpu

SMOOTH = 0.001
APPLY_NONLIN = True
CLIP = False
LANES = 128
SUB_ROWS = 256                      # rows per in-kernel fori_loop step
TARGET_TILE_BYTES = 4 * 1024 * 1024  # combined x+y bytes per grid step


def _sublane(dtype):
    # minimum row multiple so the (sublane, lane) tiling constraint holds
    return {4: 8, 2: 16, 1: 32}.get(jnp.dtype(dtype).itemsize, 8)


def _nonlin(x):
    if APPLY_NONLIN:
        # TODO(synk): on v7x with narrow inputs, consider
        # pl.reciprocal(1 + exp(-x), approx=True) if the EUP/VALU binds.
        x = jax.nn.sigmoid(x)
    if CLIP:
        x = jnp.clip(x, 0.0, 1.0)
    return x


def _dice_kernel(x_ref, y_ref, inter_ref, sx_ref, sy_ref):
    @pl.when(pl.program_id(1) == 0)
    def _():
        inter_ref[...] = jnp.zeros_like(inter_ref)
        sx_ref[...] = jnp.zeros_like(sx_ref)
        sy_ref[...] = jnp.zeros_like(sy_ref)

    tile_rows = x_ref.shape[0]
    step_rows = min(SUB_ROWS, tile_rows)
    n_steps = tile_rows // step_rows          # tile_rows is a multiple of step_rows
    r = step_rows // 8

    def body(i, carry):
        inter, sx, sy = carry
        r0 = i * step_rows
        if not isinstance(i, int):
            r0 = pl.multiple_of(r0, step_rows)
        # One load of x/y per sub-block; sigmoid + all three partial sums in
        # the same pass so no large intermediate ever round-trips VMEM.
        x = x_ref[pl.ds(r0, step_rows), :].astype(jnp.float32)
        y = y_ref[pl.ds(r0, step_rows), :].astype(jnp.float32)
        x = _nonlin(x)
        inter = inter + jnp.sum((x * y).reshape(r, 8, LANES), axis=0)
        sx = sx + jnp.sum(x.reshape(r, 8, LANES), axis=0)
        sy = sy + jnp.sum(y.reshape(r, 8, LANES), axis=0)
        return inter, sx, sy

    zeros = jnp.zeros((8, LANES), jnp.float32)
    if n_steps == 1:
        inter, sx, sy = body(0, (zeros, zeros, zeros))
    else:
        inter, sx, sy = jax.lax.fori_loop(
            0, n_steps, body, (zeros, zeros, zeros), unroll=2
        )

    inter_ref[...] += inter
    sx_ref[...] += sx
    sy_ref[...] += sy


def _partial_sums_jnp(xt, yt):
    xt = _nonlin(xt.astype(jnp.float32))
    yt = yt.astype(jnp.float32)
    return jnp.sum(xt * yt), jnp.sum(xt), jnp.sum(yt)


def _dice_from_sums(inter, sx, sy):
    intersection = 2.0 * inter + SMOOTH
    cardinal = sx + sy + SMOOTH
    return 1.0 - intersection / cardinal


def dice_loss(x, y, *, target_tile_bytes=TARGET_TILE_BYTES):
    assert x.shape == y.shape
    total = int(x.size)

    xf = x.reshape(-1)
    yf = y.reshape(-1)

    itemsize = x.dtype.itemsize + y.dtype.itemsize
    sub = max(_sublane(x.dtype), _sublane(y.dtype))
    rows_full = total // LANES

    # Tiny inputs: not even one vreg-row tile -> plain jnp.
    if rows_full < sub:
        return _dice_from_sums(*_partial_sums_jnp(xf, yf))

    # ---- tile size: big enough to amortize per-step overhead, small enough
    # for double/triple buffering inside the v5e 16 MiB scoped-VMEM default.
    bytes_per_row = LANES * itemsize
    tile_rows = max(SUB_ROWS, (target_tile_bytes // bytes_per_row) // SUB_ROWS * SUB_ROWS)
    if rows_full < tile_rows:
        if rows_full >= SUB_ROWS:
            tile_rows = (rows_full // SUB_ROWS) * SUB_ROWS
        else:
            tile_rows = (rows_full // sub) * sub

    ntiles = rows_full // tile_rows
    n_chunks = 2 if ntiles >= 2 else 1        # leading "parallel" axis (v7x 2 TCs)
    tiles_per_chunk = ntiles // n_chunks
    ntiles_main = n_chunks * tiles_per_chunk
    main_rows = ntiles_main * tile_rows
    main_elems = main_rows * LANES
    tail_elems = total - main_elems

    # ---- lane-dense 2D view; copy-free when the flat size is lane-aligned.
    if total % LANES == 0:
        x2d = xf.reshape(rows_full, LANES)    # metadata reshape, no HBM copy
        y2d = yf.reshape(rows_full, LANES)
    else:
        # Rare ragged case: one prefix copy.
        # TODO(synk): avoid via a masked partial boundary block.
        x2d = xf[:main_elems].reshape(main_rows, LANES)
        y2d = yf[:main_elems].reshape(main_rows, LANES)

    in_map = lambda c, t: (c * tiles_per_chunk + t, 0)
    out_map = lambda c, t: (c, 0)

    # 3-deep input buffering only when there is enough work to overlap.
    if tiles_per_chunk >= 3:
        in_spec = lambda: pl.BlockSpec((tile_rows, LANES), in_map,
                                       pipeline_mode=pl.Buffered(3))
    else:
        in_spec = lambda: pl.BlockSpec((tile_rows, LANES), in_map)

    out_shapes = tuple(
        jax.ShapeDtypeStruct((n_chunks * 8, LANES), jnp.float32) for _ in range(3)
    )

    cost = pl.CostEstimate(
        flops=4 * main_elems,
        transcendentals=main_elems if APPLY_NONLIN else 0,
        bytes_accessed=main_elems * itemsize + 3 * n_chunks * 8 * LANES * 4,
    )

    inter_p, sx_p, sy_p = pl.pallas_call(
        _dice_kernel,
        out_shape=out_shapes,
        grid_spec=pltpu.PrefetchScalarGridSpec(
            num_scalar_prefetch=0,
            grid=(n_chunks, tiles_per_chunk),
            in_specs=[in_spec(), in_spec()],
            out_specs=[
                pl.BlockSpec((8, LANES), out_map),
                pl.BlockSpec((8, LANES), out_map),
                pl.BlockSpec((8, LANES), out_map),
            ],
        ),
        compiler_params=pltpu.CompilerParams(
            dimension_semantics=("parallel", "arbitrary"),
        ),
        cost_estimate=cost,
    )(x2d, y2d)

    inter = jnp.sum(inter_p)
    sx = jnp.sum(sx_p)
    sy = jnp.sum(sy_p)

    # Tail: leftover rows (< one tile) plus any <128-element lane remainder.
    if tail_elems > 0:
        ti, tsx, tsy = _partial_sums_jnp(xf[main_elems:], yf[main_elems:])
        inter = inter + ti
        sx = sx + tsx
        sy = sy + tsy

    return _dice_from_sums(inter, sx, sy)


def dice_ref(x, y):
    xs = x.astype(jnp.float32)
    if APPLY_NONLIN:
        xs = jax.nn.sigmoid(xs)
    if CLIP:
        xs = jnp.clip(xs, 0.0, 1.0)
    yf = y.astype(jnp.float32)
    intersection = 2.0 * jnp.sum(xs * yf) + SMOOTH
    cardinal = jnp.sum(xs) + jnp.sum(yf) + SMOOTH
    return 1.0 - intersection / cardinal


if __name__ == "__main__":
    key = jax.random.PRNGKey(0)
    kx, ky = jax.random.split(key)
    # NCHW: batch=2, channels=4, spatial=16x16  -> 2048 elements
    x = jax.random.normal(kx, (2, 4, 16, 16), dtype=jnp.float32)
    y = (jax.random.uniform(ky, (2, 4, 16, 16)) > 0.5).astype(jnp.float32)

    out = jax.block_until_ready(dice_loss(x, y))
    ref = dice_ref(x, y)
    assert jnp.allclose(out, ref, atol=1e-5, rtol=1e-5), (out, ref)
    print("KERNEL_OK")
</pallas_src>

<mosaic_0001>
module attributes {stable_mosaic.version = 11 : i64} {
  func.func @_dice_kernel(%arg0: i32, %arg1: i32, %arg2: memref<16x128xf32, #tpu.memory_space<vmem>>, %arg3: memref<16x128xf32, #tpu.memory_space<vmem>>, %arg4: memref<8x128xf32, #tpu.memory_space<vmem>>, %arg5: memref<8x128xf32, #tpu.memory_space<vmem>>, %arg6: memref<8x128xf32, #tpu.memory_space<vmem>>) attributes {dimension_semantics = [#tpu.dimension_semantics<parallel>, #tpu.dimension_semantics<arbitrary>], iteration_bounds = array<i64: 1, 1>, scalar_prefetch = 0 : i64, scratch_operands = 0 : i64, tpu.core_type = #tpu.core_type<tc>, window_params = [{transform_indices = @transform_0, window_bounds = array<i64: 16, 128>}, {transform_indices = @transform_1, window_bounds = array<i64: 16, 128>}, {transform_indices = @transform_2, window_bounds = array<i64: 8, 128>}, {transform_indices = @transform_3, window_bounds = array<i64: 8, 128>}, {transform_indices = @transform_4, window_bounds = array<i64: 8, 128>}]} {
    %c0_i32 = arith.constant 0 : i32
    %0 = arith.cmpi eq, %arg1, %c0_i32 : i32
    %1 = arith.extui %0 : i1 to i32
    %c0_i32_0 = arith.constant 0 : i32
    %2 = arith.cmpi ne, %1, %c0_i32_0 : i32
    scf.if %2 {
      %cst_20 = arith.constant 0.000000e+00 : f32
      %30 = vector.broadcast %cst_20 : f32 to vector<8x128xf32>
      %c0_21 = arith.constant 0 : index
      %c0_22 = arith.constant 0 : index
      %31 = vector.load %arg4[%c0_21, %c0_22] : memref<8x128xf32, #tpu.memory_space<vmem>>, vector<8x128xf32>
      tpu.vector_store %arg4[%c0_21, %c0_22], %30 {strides = array<i32>} : memref<8x128xf32, #tpu.memory_space<vmem>>, vector<8x128xf32>,
      %cst_23 = arith.constant 0.000000e+00 : f32
      %32 = vector.broadcast %cst_23 : f32 to vector<8x128xf32>
      %c0_24 = arith.constant 0 : index
      %c0_25 = arith.constant 0 : index
      %33 = vector.load %arg5[%c0_24, %c0_25] : memref<8x128xf32, #tpu.memory_space<vmem>>, vector<8x128xf32>
      tpu.vector_store %arg5[%c0_24, %c0_25], %32 {strides = array<i32>} : memref<8x128xf32, #tpu.memory_space<vmem>>, vector<8x128xf32>,
      %cst_26 = arith.constant 0.000000e+00 : f32
      %34 = vector.broadcast %cst_26 : f32 to vector<8x128xf32>
      %c0_27 = arith.constant 0 : index
      %c0_28 = arith.constant 0 : index
      %35 = vector.load %arg6[%c0_27, %c0_28] : memref<8x128xf32, #tpu.memory_space<vmem>>, vector<8x128xf32>
      tpu.vector_store %arg6[%c0_27, %c0_28], %34 {strides = array<i32>} : memref<8x128xf32, #tpu.memory_space<vmem>>, vector<8x128xf32>,
    } else {
    }
    %cst = arith.constant 0.000000e+00 : f32
    %3 = vector.broadcast %cst : f32 to vector<8x128xf32>
    %c0 = arith.constant 0 : index
    %c0_1 = arith.constant 0 : index
    %4 = vector.load %arg2[%c0, %c0_1] : memref<16x128xf32, #tpu.memory_space<vmem>>, vector<16x128xf32>
    %c0_2 = arith.constant 0 : index
    %c0_3 = arith.constant 0 : index
    %5 = vector.load %arg3[%c0_2, %c0_3] : memref<16x128xf32, #tpu.memory_space<vmem>>, vector<16x128xf32>
    %6 = arith.negf %4 : vector<16x128xf32>
    %7 = math.exp %6 : vector<16x128xf32>
    %cst_4 = arith.constant 1.000000e+00 : f32
    %8 = vector.broadcast %cst_4 : f32 to vector<16x128xf32>
    %9 = arith.addf %8, %7 : vector<16x128xf32>
    %10 = arith.divf %8, %9 : vector<16x128xf32>
    %11 = arith.mulf %10, %5 : vector<16x128xf32>
    %12 = vector.shape_cast %11 : vector<16x128xf32> to vector<2x8x128xf32>
    %cst_5 = arith.constant dense<0.000000e+00> : vector<8x128xf32>
    %13 = vector.multi_reduction <add>, %12, %cst_5 [0] : vector<2x8x128xf32> to vector<8x128xf32>
    %14 = arith.addf %3, %13 : vector<8x128xf32>
    %15 = vector.shape_cast %10 : vector<16x128xf32> to vector<2x8x128xf32>
    %cst_6 = arith.constant dense<0.000000e+00> : vector<8x128xf32>
    %16 = vector.multi_reduction <add>, %15, %cst_6 [0] : vector<2x8x128xf32> to vector<8x128xf32>
    %17 = arith.addf %3, %16 : vector<8x128xf32>
    %18 = vector.shape_cast %5 : vector<16x128xf32> to vector<2x8x128xf32>
    %cst_7 = arith.constant dense<0.000000e+00> : vector<8x128xf32>
    %19 = vector.multi_reduction <add>, %18, %cst_7 [0] : vector<2x8x128xf32> to vector<8x128xf32>
    %20 = arith.addf %3, %19 : vector<8x128xf32>
    %c0_8 = arith.constant 0 : index
    %c0_9 = arith.constant 0 : index
    %21 = vector.load %arg4[%c0_8, %c0_9] : memref<8x128xf32, #tpu.memory_space<vmem>>, vector<8x128xf32>
    %22 = arith.addf %21, %14 : vector<8x128xf32>
    %c0_10 = arith.constant 0 : index
    %c0_11 = arith.constant 0 : index
    %23 = vector.load %arg4[%c0_10, %c0_11] : memref<8x128xf32, #tpu.memory_space<vmem>>, vector<8x128xf32>
    tpu.vector_store %arg4[%c0_10, %c0_11], %22 {strides = array<i32>} : memref<8x128xf32, #tpu.memory_space<vmem>>, vector<8x128xf32>,
    %c0_12 = arith.constant 0 : index
    %c0_13 = arith.constant 0 : index
    %24 = vector.load %arg5[%c0_12, %c0_13] : memref<8x128xf32, #tpu.memory_space<vmem>>, vector<8x128xf32>
    %25 = arith.addf %24, %17 : vector<8x128xf32>
    %c0_14 = arith.constant 0 : index
    %c0_15 = arith.constant 0 : index
    %26 = vector.load %arg5[%c0_14, %c0_15] : memref<8x128xf32, #tpu.memory_space<vmem>>, vector<8x128xf32>
    tpu.vector_store %arg5[%c0_14, %c0_15], %25 {strides = array<i32>} : memref<8x128xf32, #tpu.memory_space<vmem>>, vector<8x128xf32>,
    %c0_16 = arith.constant 0 : index
    %c0_17 = arith.constant 0 : index
    %27 = vector.load %arg6[%c0_16, %c0_17] : memref<8x128xf32, #tpu.memory_space<vmem>>, vector<8x128xf32>
    %28 = arith.addf %27, %20 : vector<8x128xf32>
    %c0_18 = arith.constant 0 : index
    %c0_19 = arith.constant 0 : index
    %29 = vector.load %arg6[%c0_18, %c0_19] : memref<8x128xf32, #tpu.memory_space<vmem>>, vector<8x128xf32>
    tpu.vector_store %arg6[%c0_18, %c0_19], %28 {strides = array<i32>} : memref<8x128xf32, #tpu.memory_space<vmem>>, vector<8x128xf32>,
    return
  }
  func.func @transform_0(%arg0: i32, %arg1: i32) -> (i32, i32) {
    %c1_i32 = arith.constant 1 : i32
    %0 = arith.muli %arg0, %c1_i32 : i32
    %1 = arith.addi %0, %arg1 : i32
    %c0_i32 = arith.constant 0 : i32
    %c0_i32_0 = arith.constant 0 : i32
    return %1, %c0_i32 : i32, i32
  }
  func.func @transform_1(%arg0: i32, %arg1: i32) -> (i32, i32) {
    %c1_i32 = arith.constant 1 : i32
    %0 = arith.muli %arg0, %c1_i32 : i32
    %1 = arith.addi %0, %arg1 : i32
    %c0_i32 = arith.constant 0 : i32
    %c0_i32_0 = arith.constant 0 : i32
    return %1, %c0_i32 : i32, i32
  }
  func.func @transform_2(%arg0: i32, %arg1: i32) -> (i32, i32) {
    %c0_i32 = arith.constant 0 : i32
    %c0_i32_0 = arith.constant 0 : i32
    return %arg0, %c0_i32 : i32, i32
  }
  func.func @transform_3(%arg0: i32, %arg1: i32) -> (i32, i32) {
    %c0_i32 = arith.constant 0 : i32
    %c0_i32_0 = arith.constant 0 : i32
    return %arg0, %c0_i32 : i32, i32
  }
  func.func @transform_4(%arg0: i32, %arg1: i32) -> (i32, i32) {
    %c0_i32 = arith.constant 0 : i32
    %c0_i32_0 = arith.constant 0 : i32
    return %arg0, %c0_i32 : i32, i32
  }
}

</mosaic_0001>

<llo_original>
// kernel: tpu_custom_call.1
$region0: #{tpu_custom_call.1}
  #allocation0 [shape = 'u32[]', space=smem, size = 0x4, offset = 0x4, fixed_abs, tag = 'smem constant byte address 0x4 - core index']
  #allocation1 [shape = 'u32[72,128]{1,0:T(1,128)}', space=vmem, size = 0x9000, scoped, tag = 'internal scratch']
  %s0 = inlined_call_operand.hbm [shape: f32[16,128], index: 0, kind: input, shape index: {}]
  %s1 = inlined_call_operand.hbm [shape: f32[16,128], index: 1, kind: input, shape index: {}]
  %s2 = inlined_call_operand.hbm [shape: f32[8,128], index: 2, kind: output, shape index: {0}]
  %s3 = inlined_call_operand.hbm [shape: f32[8,128], index: 3, kind: output, shape index: {1}]
  %s4 = inlined_call_operand.hbm [shape: f32[8,128], index: 4, kind: output, shape index: {2}]
  %5 = xla_tuple %s2, %s3, %s4
  %s6 = sld [smem:[#allocation0]]
  $region46: #{tpu_custom_call.1} parent=0
    _
  %s8 = ssub.s32 1, %s6
  %s9 = scalar_select 0, %s8, %s6
  $region1: #{tpu_custom_call.1} parent=0
    #allocation2 [shape = 'u8[8192]{0}', space=vmem, size = 0x2000, scoped, tag = 'input window, operand 0, single buffered']
    #allocation3 [shape = 's32[1]{0}', space=sflag, size = 0x4, scoped, tag = 'scoped memory for tpu_custom_call.1']
    #allocation4 [shape = 's32[1]{0}', space=sflag, size = 0x4, scoped, tag = 'scoped memory for tpu_custom_call.1']
    #allocation5 [shape = 'u8[8192]{0}', space=vmem, size = 0x2000, scoped, tag = 'input window, operand 1, single buffered']
    #allocation6 [shape = 's32[1]{0}', space=sflag, size = 0x4, scoped, tag = 'scoped memory for tpu_custom_call.1']
    #allocation7 [shape = 'u8[4096]{0}', space=vmem, size = 0x1000, scoped, tag = 'output window, operand 0, single buffered']
    #allocation8 [shape = 'u8[4096]{0}', space=vmem, size = 0x1000, scoped, tag = 'output window, operand 1, single buffered']
    #allocation9 [shape = 's32[1]{0}', space=sflag, size = 0x4, scoped, tag = 'scoped memory for tpu_custom_call.1']
    #allocation10 [shape = 'u8[4096]{0}', space=vmem, size = 0x1000, scoped, tag = 'output window, operand 2, single buffered']
    %10 = vsyncpa [#allocation3], 0
    %11 = vsyncpa [#allocation6], 0
    %12 = vsyncpa [#allocation4], 0
    %13 = vsyncpa [#allocation9], 0
    // Predicated region
    $region2: #{tpu_custom_call.1} parent=1 // pred_check
      _
    $region3: #{tpu_custom_call.1} parent=1 // pred_check_branch
      %15 = sbr.rel (0) target = $region5
    $region4: #{tpu_custom_call.1} parent=1 // pred_region
      %s16 = sadd.s32 0, 0
      %s17 = smul.u32 2, %s16
      %19 = vsyncadd [#allocation3], 0
      %s20 = smul.addr %s17, 8
      %s21 = scalar_lea.hbm %s0, %s20
      %s22 = sshll.u32 %s21, 4
      %s23 = int_to_ptr.hbm [resolvable:$true] %s22
      %s24 = sshll.u32 [#allocation2], 4
      %s25 = int_to_ptr.vmem [resolvable:$true] %s24
      %30 = dma.hbm_to_vmem [thread:$0]  %s23, 256, %s25, [#allocation3], 128, 128, 8
    $region5: #{tpu_custom_call.1} parent=1 // pred_fallthru
      _
    // Predicated region
    $region6: #{tpu_custom_call.1} parent=1 // pred_check
      _
    $region7: #{tpu_custom_call.1} parent=1 // pred_check_branch
      %32 = sbr.rel (0) target = $region9
    $region8: #{tpu_custom_call.1} parent=1 // pred_region
      %s33 = sadd.s32 0, 0
      %s34 = smul.u32 2, %s33
      %36 = vsyncadd [#allocation6], 0
      %s37 = smul.addr %s34, 8
      %s38 = scalar_lea.hbm %s1, %s37
      %s39 = sshll.u32 %s38, 4
      %s40 = int_to_ptr.hbm [resolvable:$true] %s39
      %s41 = sshll.u32 [#allocation5], 4
      %s42 = int_to_ptr.vmem [resolvable:$true] %s41
      %47 = dma.hbm_to_vmem [thread:$0]  %s40, 256, %s42, [#allocation6], 128, 128, 8
    $region9: #{tpu_custom_call.1} parent=1 // pred_fallthru
      _
    // Predicated region
    $region10: #{tpu_custom_call.1} parent=1 // pred_check
      _
    $region11: #{tpu_custom_call.1} parent=1 // pred_check_branch
      %49 = sbr.rel (0) target = $region13
    $region12: #{tpu_custom_call.1} parent=1 // pred_region
      %51 = dma.done [#allocation3], 256
    $region13: #{tpu_custom_call.1} parent=1 // pred_fallthru
      _
    // Predicated region
    $region14: #{tpu_custom_call.1} parent=1 // pred_check
      _
    $region15: #{tpu_custom_call.1} parent=1 // pred_check_branch
      %53 = sbr.rel (0) target = $region17
    $region16: #{tpu_custom_call.1} parent=1 // pred_region
      %55 = dma.done [#allocation6], 256
    $region17: #{tpu_custom_call.1} parent=1 // pred_fallthru
      _
    %s56 = sadd.s32 0, 0
    %s57 = smul.u32 2, %s56
    %s58 = sadd.s32 0, 0
    %s59 = smul.u32 2, %s58
    %p60 = scmp.eq.s32.totalorder 0, 0
    // Predicated region
    $region18: #{tpu_custom_call.1} parent=1 // pred_check
      %p61 = pneg %p60
    $region19: #{tpu_custom_call.1} parent=1 // pred_check_branch
      %63 = sbr.rel (%p61) target = $region21
    $region20: #{tpu_custom_call.1} parent=1 // pred_region
      %64 = vst [vmem:[#allocation7] sm:$0xff] 0.0
      %65 = vst [vmem:[#allocation8] sm:$0xff] 0.0
      %66 = vst [vmem:[#allocation10] sm:$0xff] 0.0
    $region21: #{tpu_custom_call.1} parent=1 // pred_fallthru
      _
    %v67 = vld [vmem:[#allocation2] sm:$0xff]
    %v68 = vld [vmem:[#allocation2 + $0x8] sm:$0xff]
    %v69 = vld [vmem:[#allocation5] sm:$0xff]
    %v70 = vld [vmem:[#allocation5 + $0x8] sm:$0xff]
    %v71 = vxor.u32 %v67, 2147483648
    %v72 = vxor.u32 %v68, 2147483648
    %v73 = vmul.f32 %v71, 1.442695
    %v74 = vpow.pop %v73
    %v75 = vmul.f32 %v72, 1.442695
    %v76 = vpow.pop %v75
    %v77 = vadd.f32 %v74, 1.0
    %v78 = vadd.f32 %v76, 1.0
    %v79 = vrcp.pop %v77
    %v80 = vmul.f32 %v77, %v79
    %v81 = vsub.f32 1.0, %v80
    %v82 = vmul.f32 %v79, %v81
    %v83 = vadd.f32 %v79, %v82
    %vm84 = vweird.f32 %v77
    %vm85 = vweird.f32 %v79
    %vm86 = vmor %vm84, %vm85
    %v87 = vsel %vm86, %v79, %v83
    %v88 = vand.u32 2147483647, %v77
    %vm89 = vcmp.eq.f32.partialorder %v88, 8.507059e+37
    %v90 = vand.u32 %v77, 2147483648
    %v91 = vor.u32 1.1754944e-38, %v90
    %v92 = vsel %vm89, %v91, %v87
    %v93 = vmul.f32 1.0, %v92
    %v94 = vrcp.pop %v78
    %v95 = vmul.f32 %v78, %v94
    %v96 = vsub.f32 1.0, %v95
    %v97 = vmul.f32 %v94, %v96
    %v98 = vadd.f32 %v94, %v97
    %vm99 = vweird.f32 %v78
    %vm100 = vweird.f32 %v94
    %vm101 = vmor %vm99, %vm100
    %v102 = vsel %vm101, %v94, %v98
    %v103 = vand.u32 2147483647, %v78
    %vm104 = vcmp.eq.f32.partialorder %v103, 8.507059e+37
    %v105 = vand.u32 %v78, 2147483648
    %v106 = vor.u32 1.1754944e-38, %v105
    %v107 = vsel %vm104, %v106, %v102
    %v108 = vmul.f32 1.0, %v107
    %v109 = vmul.f32 %v93, %v69
    %v110 = vmul.f32 %v108, %v70
    %v111 = vadd.f32 %v109, %v110
    %v112 = vadd.f32 %v111, 0.0
    %v113 = vadd.f32 %v93, %v108
    %v114 = vadd.f32 %v113, 0.0
    %v115 = vadd.f32 %v69, %v70
    %v116 = vadd.f32 %v115, 0.0
    %v117 = vld [vmem:[#allocation7] sm:$0xff]
    %v118 = vadd.f32 %v117, %v112
    %119 = vst [vmem:[#allocation7] sm:$0xff] %v118
    %v120 = vld [vmem:[#allocation8] sm:$0xff]
    %v121 = vadd.f32 %v120, %v114
    %122 = vst [vmem:[#allocation8] sm:$0xff] %v121
    %v123 = vld [vmem:[#allocation10] sm:$0xff]
    %v124 = vadd.f32 %v123, %v116
    %125 = vst [vmem:[#allocation10] sm:$0xff] %v124
    // Predicated region
    $region22: #{tpu_custom_call.1} parent=1 // pred_check
      _
    $region23: #{tpu_custom_call.1} parent=1 // pred_check_branch
      %127 = sbr.rel (0) target = $region25
    $region24: #{tpu_custom_call.1} parent=1 // pred_region
      %129 = vsyncadd [#allocation4], 0
      %s131 = sshll.u32 [#allocation7], 4
      %s132 = int_to_ptr.vmem [resolvable:$true] %s131
      %s133 = sshll.u32 %s2, 4
      %s134 = int_to_ptr.hbm [resolvable:$true] %s133
      %136 = dma.vmem_to_hbm [thread:$0]  %s132, 128, %s134, [#allocation4]
    $region25: #{tpu_custom_call.1} parent=1 // pred_fallthru
      _
    // Predicated region
    $region26: #{tpu_custom_call.1} parent=1 // pred_check
      _
    $region27: #{tpu_custom_call.1} parent=1 // pred_check_branch
      %138 = sbr.rel (0) target = $region29
    $region28: #{tpu_custom_call.1} parent=1 // pred_region
      %140 = vsyncadd [#allocation9], 0
      %s142 = sshll.u32 [#allocation8], 4
      %s143 = int_to_ptr.vmem [resolvable:$true] %s142
      %s144 = sshll.u32 %s3, 4
      %s145 = int_to_ptr.hbm [resolvable:$true] %s144
      %147 = dma.vmem_to_hbm [thread:$0]  %s143, 128, %s145, [#allocation9]
    $region29: #{tpu_custom_call.1} parent=1 // pred_fallthru
      _
    // Predicated region
    $region30: #{tpu_custom_call.1} parent=1 // pred_check
      _
    $region31: #{tpu_custom_call.1} parent=1 // pred_check_branch
      %149 = sbr.rel (0) target = $region33
    $region32: #{tpu_custom_call.1} parent=1 // pred_region
      %151 = vsyncadd [#allocation9], 0
      %s153 = sshll.u32 [#allocation10], 4
      %s154 = int_to_ptr.vmem [resolvable:$true] %s153
      %s155 = sshll.u32 %s4, 4
      %s156 = int_to_ptr.hbm [resolvable:$true] %s155
      %158 = dma.vmem_to_hbm [thread:$0]  %s154, 128, %s156, [#allocation9]
    $region33: #{tpu_custom_call.1} parent=1 // pred_fallthru
      _
    // Predicated region
    $region34: #{tpu_custom_call.1} parent=1 // pred_check
      _
    $region35: #{tpu_custom_call.1} parent=1 // pred_check_branch
      %160 = sbr.rel (0) target = $region37
    $region36: #{tpu_custom_call.1} parent=1 // pred_region
      %162 = dma.done [#allocation4], 128
    $region37: #{tpu_custom_call.1} parent=1 // pred_fallthru
      _
    // Predicated region
    $region38: #{tpu_custom_call.1} parent=1 // pred_check
      _
    $region39: #{tpu_custom_call.1} parent=1 // pred_check_branch
      %164 = sbr.rel (0) target = $region41
    $region40: #{tpu_custom_call.1} parent=1 // pred_region
      %166 = dma.done [#allocation9], 128
    $region41: #{tpu_custom_call.1} parent=1 // pred_fallthru
      _
    // Predicated region
    $region42: #{tpu_custom_call.1} parent=1 // pred_check
      _
    $region43: #{tpu_custom_call.1} parent=1 // pred_check_branch
      %168 = sbr.rel (0) target = $region45
    $region44: #{tpu_custom_call.1} parent=1 // pred_region
      %170 = dma.done [#allocation9], 128
    $region45: #{tpu_custom_call.1} parent=1 // pred_fallthru
      _
    %171 = vsyncpa [#allocation3], 1
    %172 = vsyncpa [#allocation6], 1
    %173 = vsyncpa [#allocation4], 1
    %174 = vsyncpa [#allocation9], 1

</llo_original>
